<compile_context>
chip_gen: v7x
topology: tpu7x:2x2x1
jax: 0.10.0
libtpu: 0.0.40
codegen_flags: <defaults>
</compile_context>

<pallas_src>
import functools

import jax
import jax.numpy as jnp
from jax import lax
from jax.experimental import pallas as pl
from jax.experimental.pallas import tpu as pltpu


def _round_up(x, m):
    return (x + m - 1) // m * m


def _pick_tile(dim, candidates):
    for c in candidates:
        if dim % c == 0:
            return c
    return dim


def _pick_m_tile(M, cap):
    """Largest multiple-of-8 divisor of M that is <= cap (or M itself if small)."""
    if M <= cap:
        return M            # full dim -> always a legal block shape
    cap = max(8, cap - cap % 8)
    for t in range(cap, 7, -8):
        if M % t == 0:
            return t
    return M                # fallback (never hit for 16-aligned sequence tiles)


def _default_vmem_limit():
    """Scale the scoped-VMEM request to the chip (128 MiB v5e/v6e, 64 MiB v7x)."""
    try:
        cap = int(pltpu.get_tpu_info().vmem_capacity_bytes)
        if cap > 0:
            return min(96 * 1024 * 1024, max(32 * 1024 * 1024, (cap * 3) // 5))
    except Exception:
        pass
    return 32 * 1024 * 1024


# ---------------------------------------------------------------------------
# Linear projection kernel: y = x @ W + b, batch folded into M.
# The f32 activation tile is cast to the MXU compute dtype inside the kernel,
# so the wrapper never materializes a bf16 copy of the activations in HBM.
# ---------------------------------------------------------------------------
def _linear_kernel(x_ref, w_ref, b_ref, o_ref, *, compute_dtype):
    x = x_ref[...].astype(compute_dtype)           # f32 tile -> bf16 for MXU
    y = jnp.dot(x, w_ref[...], preferred_element_type=jnp.float32)
    o_ref[...] = (y + b_ref[...]).astype(o_ref.dtype)   # bias added in f32


def _linear_pallas(x, w, b, *, out_dtype, compute_dtype, vmem_limit_bytes,
                   tm=None, tn=None):
    """x: (M, Din) f32, w: (Din, Np) compute_dtype, b: (1, Np) f32.  Np % 128 == 0.
    Din is used as a single full-extent K block (in_dim is small for this module)."""
    M, Din = x.shape
    _, Np = w.shape
    assert Np % 128 == 0

    if tn is None:
        tn = _pick_tile(Np, (1024, 512, 256, 128))
    if tm is None:
        # keep the double-buffered f32 x block well inside the VMEM budget
        cap = (vmem_limit_bytes // 6) // max(1, Din * x.dtype.itemsize)
        cap = max(16, min(512, cap - cap % 16 if cap >= 16 else 16))
        tm = _pick_m_tile(M, cap=cap)

    kernel = functools.partial(_linear_kernel, compute_dtype=compute_dtype)

    return pl.pallas_call(
        kernel,
        out_shape=jax.ShapeDtypeStruct((M, Np), out_dtype),
        grid_spec=pltpu.PrefetchScalarGridSpec(
            num_scalar_prefetch=0,
            grid=(M // tm, Np // tn),
            in_specs=[
                pl.BlockSpec((tm, Din), lambda i, j: (i, 0)),   # x (f32)
                pl.BlockSpec((Din, tn), lambda i, j: (0, j)),   # W (compute dtype)
                pl.BlockSpec((1, tn), lambda i, j: (0, j)),     # b (f32)
            ],
            out_specs=pl.BlockSpec((tm, tn), lambda i, j: (i, j)),
        ),
        compiler_params=pltpu.CompilerParams(
            dimension_semantics=("parallel", "parallel"),
            vmem_limit_bytes=vmem_limit_bytes,
        ),
    )(x, w, b)


# ---------------------------------------------------------------------------
# Flash-style attention kernel (online softmax over kv tiles).
# Scratch: m/l are lane-dense (tq, 128); acc is (tq, Dout_p) f32.
# ---------------------------------------------------------------------------
def _flash_attn_kernel(q_ref, k_ref, v_ref, o_ref, m_ref, l_ref, acc_ref, *,
                       valid_last, need_kv_mask, compute_dtype):
    ki = pl.program_id(1)
    nk = pl.num_programs(1)

    @pl.when(ki == 0)
    def _():
        m_ref[...] = jnp.full_like(m_ref, -jnp.inf)
        l_ref[...] = jnp.zeros_like(l_ref)
        acc_ref[...] = jnp.zeros_like(acc_ref)

    q = q_ref[0]        # (tq, Dout_p)   compute_dtype
    k = k_ref[0]        # (tk, Dout_p)
    v = v_ref[0]        # (tk, Dout_p)

    # scores = q @ k^T, contracting the last dims directly (no transpose).
    s = lax.dot_general(q, k, (((1,), (1,)), ((), ())),
                        preferred_element_type=jnp.float32)   # (tq, tk) f32

    if need_kv_mask:
        # Only the final kv tile contains padded key positions -> gate the
        # iota/compare/select out of the steady-state loop.
        def _mask_last_tile(sv):
            col = lax.broadcasted_iota(jnp.int32, sv.shape, 1)
            return jnp.where(col < valid_last, sv, -1e30)

        s = lax.cond(ki == nk - 1, _mask_last_tile, lambda sv: sv, s)

    m_prev = m_ref[...]                                          # (tq, 128)
    m_new = jnp.maximum(m_prev, jnp.max(s, axis=-1, keepdims=True))
    alpha = jnp.exp(m_prev - m_new)                              # (tq, 128)
    p = jnp.exp(s - m_new[:, :1])                                # (tq, tk) f32

    l_ref[...] = alpha * l_ref[...] + jnp.sum(p, axis=-1, keepdims=True)
    acc_ref[...] = alpha[:, :1] * acc_ref[...] + jnp.dot(
        p.astype(compute_dtype), v, preferred_element_type=jnp.float32)
    m_ref[...] = m_new

    @pl.when(ki == nk - 1)
    def _():
        inv_l = pl.reciprocal(l_ref[...], approx=True)
        o_ref[0] = (acc_ref[...] * inv_l[:, :1]).astype(o_ref.dtype)


# ---------------------------------------------------------------------------
# Wrapper: padding, projections, attention, un-padding.
# ---------------------------------------------------------------------------
def attention_pallas(Q, K, V, params, *, tq=None, tk=None,
                     compute_dtype=jnp.bfloat16, vmem_limit_bytes=None):
    """Q: (B, Lq, Din), K/V: (B, Lk, Din). Returns (B, Lq, Dout)."""
    cd = jnp.float32 if compute_dtype is None else compute_dtype

    wq, bq, wk, bk, wv, bv = (params[n] for n in ("wq", "bq", "wk", "bk", "wv", "bv"))
    B, Lq, Din = Q.shape
    _, Lk, _ = K.shape
    Dout = wq.shape[1]
    out_dtype = Q.dtype
    Dout_p = _round_up(Dout, 128)          # lane-dense output features

    if vmem_limit_bytes is None:
        vmem_limit_bytes = _default_vmem_limit()

    # ---- tile selection (multiples of 16; shrink to fit the VMEM budget) ----
    if tq is None:
        tq = min(512, _round_up(Lq, 16))
    if tk is None:
        tk = min(512, _round_up(Lk, 16))
    tq = _round_up(tq, 16)
    tk = _round_up(tk, 16)

    budget = int(0.4 * vmem_limit_bytes)
    itemsize = jnp.dtype(cd).itemsize

    def _footprint(a, b):
        blocks = 2 * (2 * a + 2 * b) * Dout_p * itemsize    # dbl-buffered q,out,k,v
        scratch = a * Dout_p * 4 + 2 * a * 128 * 4          # f32 acc + m/l
        return blocks + scratch

    while _footprint(tq, tk) > budget and max(tq, tk) > 128:
        if tk >= tq:
            tk = max(128, tk // 2)
        else:
            tq = max(128, tq // 2)
    tq = _round_up(tq, 16)
    tk = _round_up(tk, 16)

    Lq_p = _round_up(Lq, tq)
    Lk_p = _round_up(Lk, tk)
    nq = Lq_p // tq
    nk = Lk_p // tk

    # ---- sequence padding only (activations stay f32; cast happens in-kernel) ----
    def _pad_seq(x, L_target):
        if x.shape[1] == L_target:
            return x
        return jnp.pad(x, ((0, 0), (0, L_target - x.shape[1]), (0, 0)))

    def _pad_w(w):
        return jnp.pad(w, ((0, 0), (0, Dout_p - w.shape[1]))).astype(cd)

    def _pad_b(b):
        return jnp.pad(b, ((0, 0), (0, Dout_p - b.shape[1]))).astype(jnp.float32)

    Qp = _pad_seq(Q, Lq_p)
    Kp = _pad_seq(K, Lk_p)
    Vp = _pad_seq(V, Lk_p)

    # Projections: batch folded into the MXU M dimension; K/V projected once.
    q = _linear_pallas(Qp.reshape(B * Lq_p, Din), _pad_w(wq), _pad_b(bq),
                       out_dtype=cd, compute_dtype=cd,
                       vmem_limit_bytes=vmem_limit_bytes).reshape(B, Lq_p, Dout_p)
    k = _linear_pallas(Kp.reshape(B * Lk_p, Din), _pad_w(wk), _pad_b(bk),
                       out_dtype=cd, compute_dtype=cd,
                       vmem_limit_bytes=vmem_limit_bytes).reshape(B, Lk_p, Dout_p)
    v = _linear_pallas(Vp.reshape(B * Lk_p, Din), _pad_w(wv), _pad_b(bv),
                       out_dtype=cd, compute_dtype=cd,
                       vmem_limit_bytes=vmem_limit_bytes).reshape(B, Lk_p, Dout_p)

    kernel = functools.partial(
        _flash_attn_kernel,
        valid_last=int(Lk - (nk - 1) * tk),   # valid keys in the last kv tile
        need_kv_mask=(Lk_p != Lk),
        compute_dtype=cd,
    )

    # Flattened (batch, q-tile) leading axis -> even megacore sharding on v7x.
    out_p = pl.pallas_call(
        kernel,
        out_shape=jax.ShapeDtypeStruct((B, Lq_p, Dout_p), out_dtype),
        grid_spec=pltpu.PrefetchScalarGridSpec(
            num_scalar_prefetch=0,
            grid=(B * nq, nk),
            in_specs=[
                pl.BlockSpec((1, tq, Dout_p), lambda i, ki: (i // nq, i % nq, 0)),  # q
                pl.BlockSpec((1, tk, Dout_p), lambda i, ki: (i // nq, ki, 0)),      # k
                pl.BlockSpec((1, tk, Dout_p), lambda i, ki: (i // nq, ki, 0)),      # v
            ],
            out_specs=pl.BlockSpec((1, tq, Dout_p), lambda i, ki: (i // nq, i % nq, 0)),
            scratch_shapes=[
                pltpu.VMEM((tq, 128), jnp.float32),      # running max m (lane-dense)
                pltpu.VMEM((tq, 128), jnp.float32),      # running sum l (lane-dense)
                pltpu.VMEM((tq, Dout_p), jnp.float32),   # output accumulator
            ],
        ),
        compiler_params=pltpu.CompilerParams(
            dimension_semantics=("parallel", "arbitrary"),
            vmem_limit_bytes=vmem_limit_bytes,
        ),
    )(q, k, v)

    return out_p[:, :Lq, :Dout]


# ---------------------------------------------------------------------------
# Params / reference
# ---------------------------------------------------------------------------
def init_params(key, in_dim, out_dim):
    """Mimics nn.Linear default init; W stored as (in_dim, out_dim): y = x@W + b."""
    bound = 1.0 / (in_dim ** 0.5)
    keys = jax.random.split(key, 6)
    mk_w = lambda k: jax.random.uniform(k, (in_dim, out_dim), jnp.float32, -bound, bound)
    mk_b = lambda k: jax.random.uniform(k, (1, out_dim), jnp.float32, -bound, bound)
    return {
        "wq": mk_w(keys[0]), "bq": mk_b(keys[1]),
        "wk": mk_w(keys[2]), "bk": mk_b(keys[3]),
        "wv": mk_w(keys[4]), "bv": mk_b(keys[5]),
    }


def attention_reference(Q, K, V, params, compute_dtype=None):
    """Pure-JAX reference. With compute_dtype=bf16 it mimics the kernel's
    bf16-MXU / f32-accumulate precision; with None it is the exact f32 math."""
    cd = compute_dtype
    cast = (lambda x: x.astype(cd)) if cd is not None else (lambda x: x)

    q = jnp.dot(cast(Q), cast(params["wq"]), preferred_element_type=jnp.float32) + params["bq"][0]
    k = jnp.dot(cast(K), cast(params["wk"]), preferred_element_type=jnp.float32) + params["bk"][0]
    v = jnp.dot(cast(V), cast(params["wv"]), preferred_element_type=jnp.float32) + params["bv"][0]

    s = jnp.einsum("bqd,bkd->bqk", cast(q), cast(k), preferred_element_type=jnp.float32)
    m = jnp.max(s, axis=-1, keepdims=True)
    e = jnp.exp(s - m)
    num = jnp.einsum("bqk,bkd->bqd", cast(e), cast(v), preferred_element_type=jnp.float32)
    return num / jnp.sum(e, axis=-1, keepdims=True)


# ---------------------------------------------------------------------------
# Test
# ---------------------------------------------------------------------------
if __name__ == "__main__":
    key = jax.random.PRNGKey(0)

    # Case 1: shapes from the original module test (tiny).
    B, Lq, Lk, in_dim, out_dim = 2, 8, 8, 32, 32
    kq, kk_, kv_, kp = jax.random.split(key, 4)
    Q = jax.random.normal(kq, (B, Lq, in_dim), jnp.float32)
    K = jax.random.normal(kk_, (B, Lk, in_dim), jnp.float32)
    V = jax.random.normal(kv_, (B, Lk, in_dim), jnp.float32)
    params = init_params(kp, in_dim, out_dim)

    out = jax.block_until_ready(attention_pallas(Q, K, V, params))
    assert out.shape == (B, Lq, out_dim)

    ref_match = attention_reference(Q, K, V, params, compute_dtype=jnp.bfloat16)
    ref_f32 = attention_reference(Q, K, V, params, compute_dtype=None)
    assert jnp.allclose(out, ref_match, atol=5e-3, rtol=5e-3), "case1: mismatch vs matched ref"
    assert jnp.allclose(out, ref_f32, atol=5e-2, rtol=5e-2), "case1: mismatch vs f32 ref"

    # Case 2: ragged shapes exercising seq padding + last-tile kv masking.
    B2, Lq2, Lk2, in2, out2 = 2, 16, 72, 40, 24
    k2 = jax.random.split(jax.random.PRNGKey(1), 4)
    Q2 = jax.random.normal(k2[0], (B2, Lq2, in2), jnp.float32)
    K2 = jax.random.normal(k2[1], (B2, Lk2, in2), jnp.float32)
    V2 = jax.random.normal(k2[2], (B2, Lk2, in2), jnp.float32)
    params2 = init_params(k2[3], in2, out2)

    out2_arr = jax.block_until_ready(
        attention_pallas(Q2, K2, V2, params2, tq=16, tk=128))
    assert out2_arr.shape == (B2, Lq2, out2)

    ref2_match = attention_reference(Q2, K2, V2, params2, compute_dtype=jnp.bfloat16)
    ref2_f32 = attention_reference(Q2, K2, V2, params2, compute_dtype=None)
    assert jnp.allclose(out2_arr, ref2_match, atol=5e-3, rtol=5e-3), "case2: mismatch vs matched ref"
    assert jnp.allclose(out2_arr, ref2_f32, atol=5e-2, rtol=5e-2), "case2: mismatch vs f32 ref"

    print("KERNEL_OK")
</pallas_src>

<mosaic_0001>
module attributes {stable_mosaic.version = 11 : i64} {
  func.func @_linear_kernel(%arg0: i32, %arg1: i32, %arg2: memref<32x32xf32, #tpu.memory_space<vmem>>, %arg3: memref<32x128xbf16, #tpu.memory_space<vmem>>, %arg4: memref<1x128xf32, #tpu.memory_space<vmem>>, %arg5: memref<32x128xbf16, #tpu.memory_space<vmem>>) attributes {dimension_semantics = [#tpu.dimension_semantics<parallel>, #tpu.dimension_semantics<parallel>], iteration_bounds = array<i64: 1, 1>, scalar_prefetch = 0 : i64, scratch_operands = 0 : i64, tpu.core_type = #tpu.core_type<tc>, window_params = [{transform_indices = @transform_0, window_bounds = array<i64: 32, 32>}, {transform_indices = @transform_1, window_bounds = array<i64: 32, 128>}, {transform_indices = @transform_2, window_bounds = array<i64: 1, 128>}, {transform_indices = @transform_3, window_bounds = array<i64: 32, 128>}]} {
    %c0 = arith.constant 0 : index
    %c0_0 = arith.constant 0 : index
    %0 = vector.load %arg2[%c0, %c0_0] : memref<32x32xf32, #tpu.memory_space<vmem>>, vector<32x32xf32>
    %1 = arith.truncf %0 : vector<32x32xf32> to vector<32x32xbf16>
    %c0_1 = arith.constant 0 : index
    %c0_2 = arith.constant 0 : index
    %2 = vector.load %arg3[%c0_1, %c0_2] : memref<32x128xbf16, #tpu.memory_space<vmem>>, vector<32x128xbf16>
    %cst = arith.constant dense<0.000000e+00> : vector<32x128xf32>
    %3 = tpu.matmul %1, %2, %cst {dimension_numbers = #tpu.dot_dimension_numbers<[1], [0], [0], [1], [0, 0, 1, 1], [], []>} : vector<32x32xbf16>, vector<32x128xbf16>, vector<32x128xf32> -> vector<32x128xf32>
    %c0_3 = arith.constant 0 : index
    %c0_4 = arith.constant 0 : index
    %4 = vector.load %arg4[%c0_3, %c0_4] : memref<1x128xf32, #tpu.memory_space<vmem>>, vector<1x128xf32>
    %5 = vector.broadcast %4 : vector<1x128xf32> to vector<32x128xf32>
    %6 = arith.addf %3, %5 : vector<32x128xf32>
    %7 = arith.truncf %6 : vector<32x128xf32> to vector<32x128xbf16>
    %c0_5 = arith.constant 0 : index
    %c0_6 = arith.constant 0 : index
    %8 = vector.load %arg5[%c0_5, %c0_6] : memref<32x128xbf16, #tpu.memory_space<vmem>>, vector<32x128xbf16>
    tpu.vector_store %arg5[%c0_5, %c0_6], %7 {strides = array<i32>} : memref<32x128xbf16, #tpu.memory_space<vmem>>, vector<32x128xbf16>,
    return
  }
  func.func @transform_0(%arg0: i32, %arg1: i32) -> (i32, i32) {
    %c0_i32 = arith.constant 0 : i32
    %c0_i32_0 = arith.constant 0 : i32
    return %arg0, %c0_i32 : i32, i32
  }
  func.func @transform_1(%arg0: i32, %arg1: i32) -> (i32, i32) {
    %c0_i32 = arith.constant 0 : i32
    %c0_i32_0 = arith.constant 0 : i32
    return %c0_i32, %arg1 : i32, i32
  }
  func.func @transform_2(%arg0: i32, %arg1: i32) -> (i32, i32) {
    %c0_i32 = arith.constant 0 : i32
    %c0_i32_0 = arith.constant 0 : i32
    return %c0_i32, %arg1 : i32, i32
  }
  func.func @transform_3(%arg0: i32, %arg1: i32) -> (i32, i32) {
    %c0_i32 = arith.constant 0 : i32
    return %arg0, %arg1 : i32, i32
  }
}

</mosaic_0001>

<llo_original>
// kernel: tpu_custom_call.1
$region0: #{tpu_custom_call.1}
  #allocation0 [shape = 'u32[]', space=smem, size = 0x4, offset = 0x4, fixed_abs, tag = 'smem constant byte address 0x4 - core index']
  #allocation1 [shape = 'u32[144,128]{1,0:T(1,128)}', space=vmem, size = 0x12000, scoped, tag = 'internal scratch']
  %s0 = inlined_call_operand.hbm [shape: f32[32,32], index: 0, kind: input, shape index: {}]
  %s1 = inlined_call_operand.hbm [shape: bf16[32,128], index: 1, kind: input, shape index: {}]
  %s2 = inlined_call_operand.vmem [shape: f32[1,128], index: 2, kind: input, shape index: {}]
  %s3 = inlined_call_operand.hbm [shape: bf16[32,128], index: 3, kind: output, shape index: {}]
  %s4 = sld [smem:[#allocation0]]
  $region30: #{tpu_custom_call.1} parent=0
    _
  %s6 = ssub.s32 1, %s4
  %s7 = scalar_select 0, %s6, %s4
  $region1: #{tpu_custom_call.1} parent=0
    #allocation2 [shape = 'u8[16384]{0}', space=vmem, size = 0x4000, scoped, tag = 'input window, operand 0, single buffered']
    #allocation3 [shape = 's32[1]{0}', space=sflag, size = 0x4, scoped, tag = 'scoped memory for tpu_custom_call.1']
    #allocation4 [shape = 's32[1]{0}', space=sflag, size = 0x4, scoped, tag = 'scoped memory for tpu_custom_call.1']
    #allocation5 [shape = 'u8[8192]{0}', space=vmem, size = 0x2000, scoped, tag = 'input window, operand 1, single buffered']
    #allocation6 [shape = 's32[1]{0}', space=sflag, size = 0x4, scoped, tag = 'scoped memory for tpu_custom_call.1']
    #allocation7 [shape = 'u8[8192]{0}', space=vmem, size = 0x2000, scoped, tag = 'output window, operand 0, single buffered']
    %8 = vsyncpa [#allocation3], 0
    %9 = vsyncpa [#allocation6], 0
    %10 = vsyncpa [#allocation4], 0
    // Predicated region
    $region2: #{tpu_custom_call.1} parent=1 // pred_check
      _
    $region3: #{tpu_custom_call.1} parent=1 // pred_check_branch
      %12 = sbr.rel (0) target = $region5
    $region4: #{tpu_custom_call.1} parent=1 // pred_region
      %s14 = ssub.s32 512, 512
      %15 = vsyncadd [#allocation3], %s14
      %s16 = sshll.u32 [#allocation2], 4
      %s17 = int_to_ptr.vmem [resolvable:$true] %s16
      %22 = dma.hbm_to_vmem [thread:$0]  %s0, 512, %s17, [#allocation3], 128, 128, 8
    $region5: #{tpu_custom_call.1} parent=1 // pred_fallthru
      _
    // Predicated region
    $region6: #{tpu_custom_call.1} parent=1 // pred_check
      _
    $region7: #{tpu_custom_call.1} parent=1 // pred_check_branch
      %24 = sbr.rel (0) target = $region9
    $region8: #{tpu_custom_call.1} parent=1 // pred_region
      %s26 = ssub.s32 256, 256
      %27 = vsyncadd [#allocation6], %s26
      %s28 = sshll.u32 [#allocation5], 4
      %s29 = int_to_ptr.vmem [resolvable:$true] %s28
      %34 = dma.hbm_to_vmem [thread:$0]  %s1, 256, %s29, [#allocation6], 64, 64, 4
    $region9: #{tpu_custom_call.1} parent=1 // pred_fallthru
      _
    // Predicated region
    $region10: #{tpu_custom_call.1} parent=1 // pred_check
      _
    $region11: #{tpu_custom_call.1} parent=1 // pred_check_branch
      %36 = sbr.rel (0) target = $region13
    $region12: #{tpu_custom_call.1} parent=1 // pred_region
      _
    $region13: #{tpu_custom_call.1} parent=1 // pred_fallthru
      _
    // Predicated region
    $region14: #{tpu_custom_call.1} parent=1 // pred_check
      _
    $region15: #{tpu_custom_call.1} parent=1 // pred_check_branch
      %38 = sbr.rel (0) target = $region17
    $region16: #{tpu_custom_call.1} parent=1 // pred_region
      %39 = dma.done [#allocation3], 512
    $region17: #{tpu_custom_call.1} parent=1 // pred_fallthru
      _
    // Predicated region
    $region18: #{tpu_custom_call.1} parent=1 // pred_check
      _
    $region19: #{tpu_custom_call.1} parent=1 // pred_check_branch
      %41 = sbr.rel (0) target = $region21
    $region20: #{tpu_custom_call.1} parent=1 // pred_region
      %42 = dma.done [#allocation6], 256
    $region21: #{tpu_custom_call.1} parent=1 // pred_fallthru
      _
    %v44 = vld [vmem:[#allocation2] sm:$0xff]
    %v45 = vld [vmem:[#allocation2 + $0x8] sm:$0xff]
    %v46 = vld [vmem:[#allocation2 + $0x10] sm:$0xff]
    %v47 = vld [vmem:[#allocation2 + $0x18] sm:$0xff]
    %v48 = vpack.c.bf16 %v45, %v44
    %v49 = vpack.c.bf16 %v47, %v46
    %v50 = vld [vmem:[#allocation5] sm:$0xf]
    %v51 = vld [vmem:[#allocation5 + $0x4] sm:$0xf]
    %v52 = vld [vmem:[#allocation5 + $0x8] sm:$0xf]
    %v53 = vld [vmem:[#allocation5 + $0xc] sm:$0xf]
    %v54 = vld [vmem:[%s2] sm:$0x1]
    %v56 = vlaneseq
    %v57 = vshrl.u32 %v56, 7
    %v58 = vsub.s32 0, %v57
    %v59 = vrot.slane %v54, %v58
    %v65 = vunpack.c.l.b16 %v50
    %v66 = vunpack.c.l.b16 %v51
    %v67 = vunpack.c.l.b16 %v52
    %v68 = vunpack.c.l.b16 %v53
    %v69 = vpack.c.b16 %v66, %v65
    %v70 = vpack.c.b16 %v68, %v67
    %vm73 = vcmask 261120
    %v75 = vsel %vm73, %v48, 0
    %v78 = vsel %vm73, %v49, 0
    %80 = vmatprep.subr.bf16.mxu0 0
    %81 = vmatpush1.bf16.msra.mxu0 %v69
    %82 = vmatprep.subr.bf16.mxu0 0
    %83 = vmatpush1.bf16.msra.mxu0 %v70
    %84 = vmatprep.subr.bf16.mxu0 0
    %85 = vmatpush1.bf16.msra.mxu0 0
    %86 = vmatprep.subr.bf16.mxu0 0
    %87 = vmatpush1.bf16.msra.mxu0 0
    %88 = vmatprep.subr.bf16.mxu0 0
    %89 = vmatpush1.bf16.msra.mxu0 0
    %90 = vmatprep.subr.bf16.mxu0 0
    %91 = vmatpush1.bf16.msra.mxu0 0
    %92 = vmatprep.subr.bf16.mxu0 0
    %93 = vmatpush1.bf16.msra.mxu0 0
    %94 = vmatprep.subr.bf16.mxu0 0
    %95 = vmatpush1.bf16.msra.mxu0 0
    %96 = vmatprep.subr.bf16.mxu0 0
    %97 = vmatpush1.bf16.msra.mxu0 0
    %98 = vmatprep.subr.bf16.mxu0 0
    %99 = vmatpush1.bf16.msra.mxu0 0
    %100 = vmatprep.subr.bf16.mxu0 0
    %101 = vmatpush1.bf16.msra.mxu0 0
    %102 = vmatprep.subr.bf16.mxu0 0
    %103 = vmatpush1.bf16.msra.mxu0 0
    %104 = vmatprep.subr.bf16.mxu0 0
    %105 = vmatpush1.bf16.msra.mxu0 0
    %106 = vmatprep.subr.bf16.mxu0 0
    %107 = vmatpush1.bf16.msra.mxu0 0
    %108 = vmatprep.subr.bf16.mxu0 0
    %109 = vmatpush1.bf16.msra.mxu0 0
    %110 = vmatprep.subr.bf16.mxu0 0
    %111 = vmatpush1.bf16.msra.mxu0 0
    %112 = vmatprep.mubr.bf16.mxu0 0
    %113 = vmatmul.mubr.bf16.gmra.mrb[0].mxu0 %v75
    %v114 = vpop.f32.mrb[0].mxu0
    %v115 = vadd.f32 %v59, %v114
    %v116 = vpop.f32.mrb[0].mxu0
    %v117 = vpop.f32.mrb[0].mxu0
    %v118 = vadd.f32 %v59, %v117
    %v119 = vpop.f32.mrb[0].mxu0
    %120 = vmatprep.mubr.bf16.mxu0 0
    %121 = vmatmul.mubr.bf16.gmra.mrb[0].mxu0 %v78
    %v122 = vpop.f32.mrb[0].mxu0
    %v123 = vadd.f32 %v59, %v122
    %v124 = vpop.f32.mrb[0].mxu0
    %v125 = vpop.f32.mrb[0].mxu0
    %v126 = vadd.f32 %v59, %v125
    %v127 = vpop.f32.mrb[0].mxu0
    %128 = vdwg.mxu0
    %v129 = vpack.c.bf16 %v118, %v115
    %v130 = vpack.c.bf16 %v126, %v123
    %v133 = vunpack.c.l.b16 %v129
    %v134 = vunpack.c.h.b16 %v129
    %v135 = vunpack.c.l.b16 %v130
    %v136 = vunpack.c.h.b16 %v130
    %v137 = vpack.c.b16 %v133, %v133
    %v138 = vpack.c.b16 %v134, %v134
    %v139 = vpack.c.b16 %v135, %v135
    %v140 = vpack.c.b16 %v136, %v136
    %145 = vst [vmem:[#allocation7] sm:$0xf] %v137
    %146 = vst [vmem:[#allocation7 + $0x4] sm:$0xf] %v138
    %147 = vst [vmem:[#allocation7 + $0x8] sm:$0xf] %v139
    %148 = vst [vmem:[#allocation7 + $0xc] sm:$0xf] %v140
    // Predicated region
    $region22: #{tpu_custom_call.1} parent=1 // pred_check
      _
    $region23: #{tpu_custom_call.1} parent=1 // pred_check_branch
      %150 = sbr.rel (0) target = $region25
    $region24: #{tpu_custom_call.1} parent=1 // pred_region
      %s152 = ssub.s32 256, 256
      %153 = vsyncadd [#allocation4], %s152
      %s154 = sshll.u32 [#allocation7], 4
      %s155 = int_to_ptr.vmem [resolvable:$true] %s154
      %160 = dma.vmem_to_hbm [thread:$0]  %s155, 256, %s3, [#allocation4], 64, 64, 4
    $region25: #{tpu_custom_call.1} parent=1 // pred_fallthru
      _
    // Predicated region
    $region26: #{tpu_custom_call.1} parent=1 // pred_check
      _
    $region27: #{tpu_custom_call.1} parent=1 // pred_check_branch
      %162 = sbr.rel (0) target = $region29
    $region28: #{tpu_custom_call.1} parent=1 // pred_region
      %163 = dma.done [#allocation4], 256
    $region29: #{tpu_custom_call.1} parent=1 // pred_fallthru
      _
    %164 = vsyncpa [#allocation3], 1
    %165 = vsyncpa [#allocation6], 1
    %166 = vsyncpa [#allocation4], 1

</llo_original>
